<compile_context>
chip_gen: v7x
topology: tpu7x:2x2x1
jax: 0.10.0
libtpu: 0.0.40
codegen_flags: <defaults>
</compile_context>

<pallas_src>
import math
import numpy as np
import jax
import jax.numpy as jnp
from jax.experimental import pallas as pl
from jax.experimental.pallas import tpu as pltpu


# ----------------------------------------------------------------------------------------------
# compiler params helpers
# ----------------------------------------------------------------------------------------------
_CompilerParamsCls = getattr(pltpu, "CompilerParams", None)
if _CompilerParamsCls is None:  # TODO(synk): fallback for older JAX naming
    _CompilerParamsCls = getattr(pltpu, "TPUCompilerParams")

_VMEM_LIMIT_BYTES = 32 * 1024 * 1024  # safe on v5e/v6e/v7x; actual blocks stay far below this


def _compiler_params(dimension_semantics):
    return _CompilerParamsCls(dimension_semantics=dimension_semantics,
                              vmem_limit_bytes=_VMEM_LIMIT_BYTES)


def _pick_tile(hw):
    """Largest lane-dense tile (multiple of 128) dividing hw, capped at 512; else the full extent."""
    for t in (512, 256, 128):
        if hw % t == 0:
            return t
    return hw


# ----------------------------------------------------------------------------------------------
# torchvision affine matrix (host-side, static)
# ----------------------------------------------------------------------------------------------
def _get_inverse_affine_matrix(center, angle, translate, scale, shear):
    # Exact re-implementation of torchvision.transforms.functional._get_inverse_affine_matrix.
    rot = math.radians(angle)
    sx = math.radians(shear[0])
    sy = math.radians(shear[1])
    cx, cy = center
    tx, ty = translate
    a = math.cos(rot - sy) / math.cos(sy)
    b = -math.cos(rot - sy) * math.tan(sx) / math.cos(sy) - math.sin(rot)
    c = math.sin(rot - sy) / math.cos(sy)
    d = -math.sin(rot - sy) * math.tan(sx) / math.cos(sy) + math.cos(rot)
    m = [d, -b, 0.0, -c, a, 0.0]
    m = [v / scale for v in m]
    m[2] += m[0] * (-cx - tx) + m[1] * (-cy - ty)
    m[5] += m[3] * (-cx - tx) + m[4] * (-cy - ty)
    m[2] += cx
    m[5] += cy
    return m


def _affine_theta(H, W, angle, translate, shear, center):
    if center is None:
        center_f = [0.0, 0.0]
    else:
        center_f = [1.0 * (c - s * 0.5) for c, s in zip(center, [W, H])]
    translate_f = [1.0 * t for t in translate]
    return _get_inverse_affine_matrix(center_f, angle, translate_f, 1.0, shear)


def _geom_theta(op_name, magnitude, H, W):
    if op_name == "ShearX":
        return _affine_theta(H, W, 0.0, [0, 0], [math.degrees(math.atan(magnitude)), 0.0], [0, 0])
    if op_name == "ShearY":
        return _affine_theta(H, W, 0.0, [0, 0], [0.0, math.degrees(math.atan(magnitude))], [0, 0])
    if op_name == "TranslateX":
        return _affine_theta(H, W, 0.0, [int(magnitude), 0], [0.0, 0.0], None)
    if op_name == "TranslateY":
        return _affine_theta(H, W, 0.0, [0, int(magnitude)], [0.0, 0.0], None)
    if op_name == "Rotate":
        return _get_inverse_affine_matrix([0.0, 0.0], -magnitude, [0.0, 0.0], 1.0, [0.0, 0.0])
    raise ValueError(op_name)


def _nearest_src_indices(theta, H, W):
    """Static per-output-pixel source linear index for NEAREST affine (torchvision grid_sample
    convention, align_corners=False); -1 marks out-of-bounds (fill)."""
    t = [np.float32(v) for v in theta]
    p = np.arange(H * W, dtype=np.float32)
    i = np.floor(p / np.float32(W))
    j = p - i * np.float32(W)
    bx = (j - np.float32(0.5 * W) + np.float32(0.5)).astype(np.float32)
    by = (i - np.float32(0.5 * H) + np.float32(0.5)).astype(np.float32)
    sx = np.round(t[0] * bx + t[1] * by + t[2] + np.float32(0.5 * (W - 1)))
    sy = np.round(t[3] * bx + t[4] * by + t[5] + np.float32(0.5 * (H - 1)))
    inb = (sx >= 0) & (sx <= W - 1) & (sy >= 0) & (sy <= H - 1)
    src = np.where(inb, sy * W + sx, -1.0)
    return src.astype(np.int32)  # (HW,)


# ----------------------------------------------------------------------------------------------
# geometric ops: tiled one-hot gather (grid = (N, out-tiles, src-tiles), src axis is the reduction)
# ----------------------------------------------------------------------------------------------
def _affine_gather(slab, theta, fill_list, H, W):
    N, C, HW = slab.shape
    src = _nearest_src_indices(theta, H, W)
    idx = jnp.asarray(src.reshape(1, HW))
    fill = jnp.asarray(np.asarray(fill_list, np.float32).reshape(1, C, 1))
    tq = _pick_tile(HW)
    ts = _pick_tile(HW)
    nq = HW // tq
    ns = HW // ts

    def kernel(idx_ref, x_ref, fill_ref, o_ref):
        s = pl.program_id(2)

        @pl.when(s == 0)
        def _init():
            o_ref[...] = jnp.zeros_like(o_ref)

        idxb = idx_ref[...]                                              # (1, tq) int32
        src_id = jax.lax.broadcasted_iota(jnp.int32, (ts, tq), 0) + s * ts
        g = (src_id == idxb).astype(jnp.float32)                         # (ts, tq) 0/1 (exact)
        o_ref[...] += jnp.dot(x_ref[0], g,
                              preferred_element_type=jnp.float32)[None]  # (1, C, tq)

        @pl.when(s == ns - 1)
        def _finish():
            invalid = (idxb < 0).astype(jnp.float32)                     # (1, tq)
            o_ref[...] += fill_ref[...] * invalid                        # constant fill where OOB

    return pl.pallas_call(
        kernel,
        out_shape=jax.ShapeDtypeStruct((N, C, HW), jnp.float32),
        grid=(N, nq, ns),
        in_specs=[
            pl.BlockSpec((1, tq), lambda n, q, s: (0, q)),
            pl.BlockSpec((1, C, ts), lambda n, q, s: (n, 0, s)),
            pl.BlockSpec((1, C, 1), lambda n, q, s: (0, 0, 0)),
        ],
        out_specs=pl.BlockSpec((1, C, tq), lambda n, q, s: (n, 0, q)),
        compiler_params=_compiler_params(("parallel", "parallel", "arbitrary")),
    )(idx, slab, fill)


# ----------------------------------------------------------------------------------------------
# fused value ops (grid over images, block = (1, C, H*W), lane axis = pixels)
# ----------------------------------------------------------------------------------------------
_GRAY_W = (0.2989, 0.587, 0.114)
_VALUE_OPS = frozenset({"Identity", "Brightness", "Color", "Contrast", "Posterize",
                        "Solarize", "AutoContrast", "CutOut"})
_GEOM_OPS = frozenset({"ShearX", "ShearY", "TranslateX", "TranslateY", "Rotate"})


def _value_ops(slab, ops, H, W):
    N, C, HW = slab.shape

    def kernel(x_ref, o_ref):
        x = x_ref[...]                                                   # (1, C, HW)
        for name, mag in ops:
            if name == "Identity":
                continue
            if name == "Brightness":
                x = jnp.clip((1.0 + mag) * x, 0.0, 1.0)
            elif name == "Color":
                if C >= 3:
                    f = 1.0 + mag
                    gray = (_GRAY_W[0] * x[:, 0:1] + _GRAY_W[1] * x[:, 1:2]
                            + _GRAY_W[2] * x[:, 2:3])
                    x = jnp.clip(f * x + (1.0 - f) * gray, 0.0, 1.0)
            elif name == "Contrast":
                f = 1.0 + mag
                if C >= 3:
                    gray = (_GRAY_W[0] * x[:, 0:1] + _GRAY_W[1] * x[:, 1:2]
                            + _GRAY_W[2] * x[:, 2:3])
                else:
                    gray = x
                denom = float(gray.shape[1] * HW)
                mean = jnp.sum(gray, axis=(1, 2), keepdims=True) * (1.0 / denom)
                x = jnp.clip(f * x + (1.0 - f) * mean, 0.0, 1.0)
            elif name == "Posterize":
                keep = float(2 ** (8 - int(mag)))
                q = jnp.clip(jnp.floor(x * 255.0), 0.0, 255.0)
                x = (jnp.floor(q / keep) * keep) * (1.0 / 255.0)
            elif name == "Solarize":
                thr = float(mag) / 255.0
                x = jnp.where(x >= thr, 1.0 - x, x)
            elif name == "AutoContrast":
                mn = jnp.min(x, axis=2, keepdims=True)
                mx = jnp.max(x, axis=2, keepdims=True)
                rng = mx - mn
                degen = rng <= 0.0
                safe = jnp.where(degen, 1.0, rng)
                scale = jnp.where(degen, 1.0, 1.0 / safe)
                mn0 = jnp.where(degen, 0.0, mn)
                x = jnp.clip((x - mn0) * scale, 0.0, 1.0)
            elif name == "CutOut":
                side = int(round(mag * min(H, W)))
                if side > 0:
                    r0 = float((H - side) // 2)
                    c0 = float((W - side) // 2)
                    p = jax.lax.broadcasted_iota(jnp.int32, (1, 1, HW), 2).astype(jnp.float32)
                    pi = jnp.floor((p + 0.5) / float(W))
                    pj = p - pi * float(W)
                    inside = ((pi >= r0) & (pi < r0 + side) &
                              (pj >= c0) & (pj < c0 + side))
                    x = jnp.where(inside, 0.0, x)
        o_ref[...] = x

    return pl.pallas_call(
        kernel,
        out_shape=jax.ShapeDtypeStruct((N, C, HW), jnp.float32),
        grid=(N,),
        in_specs=[pl.BlockSpec((1, C, HW), lambda n: (n, 0, 0))],
        out_specs=pl.BlockSpec((1, C, HW), lambda n: (n, 0, 0)),
        compiler_params=_compiler_params(("parallel",)),
    )(slab)


# ----------------------------------------------------------------------------------------------
# Sharpness: 3x3 stencil via pltpu.roll on the flattened (C, H*W) slab (interior pixels only)
# ----------------------------------------------------------------------------------------------
def _sharpness(slab, factor, H, W):
    N, C, HW = slab.shape
    if H <= 2 or W <= 2:
        return slab
    shifts = [(-(di * W + dj)) % HW
              for di in (-1, 0, 1) for dj in (-1, 0, 1) if not (di == 0 and dj == 0)]

    def kernel(x_ref, o_ref):
        x = x_ref[0]                                                     # (C, HW)
        acc = 5.0 * x
        for sh in shifts:
            acc = acc + pltpu.roll(x, sh, 1)
        blurred = acc * (1.0 / 13.0)
        p = jax.lax.broadcasted_iota(jnp.int32, (1, HW), 1).astype(jnp.float32)
        pi = jnp.floor((p + 0.5) / float(W))
        pj = p - pi * float(W)
        interior = ((pi >= 1.0) & (pi <= float(H - 2)) &
                    (pj >= 1.0) & (pj <= float(W - 2)))
        degenerate = jnp.where(interior, blurred, x)                     # border keeps original
        o_ref[0] = jnp.clip(factor * x + (1.0 - factor) * degenerate, 0.0, 1.0)

    return pl.pallas_call(
        kernel,
        out_shape=jax.ShapeDtypeStruct((N, C, HW), jnp.float32),
        grid=(N,),
        in_specs=[pl.BlockSpec((1, C, HW), lambda n: (n, 0, 0))],
        out_specs=pl.BlockSpec((1, C, HW), lambda n: (n, 0, 0)),
        compiler_params=_compiler_params(("parallel",)),
    )(slab)


# ----------------------------------------------------------------------------------------------
# Equalize: per-image kernel (grid over N, channels unrolled), histogram LUT in-kernel
# ----------------------------------------------------------------------------------------------
def _equalize(slab, H, W):
    N, C, HW = slab.shape

    def kernel(x_ref, o_ref):
        x = x_ref[...]                                                   # (1, C, HW)
        lev = jax.lax.broadcasted_iota(jnp.int32, (256, HW), 0)
        tri = (jax.lax.broadcasted_iota(jnp.int32, (256, 256), 1)
               <= jax.lax.broadcasted_iota(jnp.int32, (256, 256), 0)).astype(jnp.float32)
        idxf = jax.lax.broadcasted_iota(jnp.int32, (256, 1), 0).astype(jnp.float32)
        outs = []
        for c in range(C):
            xc = x[0, c:c + 1, :]                                        # (1, HW)
            qv = jnp.clip(jnp.round(xc * 255.0), 0.0, 255.0).astype(jnp.int32)
            onehot = (lev == qv).astype(jnp.float32)                     # (256, HW)
            hist = jnp.sum(onehot, axis=1, keepdims=True)                # (256, 1)
            cum = jnp.dot(tri, hist, preferred_element_type=jnp.float32)
            last_idx = jnp.max(jnp.where(hist > 0.0, idxf, -1.0), axis=(0, 1), keepdims=True)
            last_cnt = jnp.sum(jnp.where(idxf == last_idx, hist, 0.0), axis=(0, 1), keepdims=True)
            step = jnp.floor((float(HW) - last_cnt) / 255.0)             # (1, 1)
            lut = jnp.floor((cum - hist + jnp.floor(step / 2.0)) / jnp.maximum(step, 1.0))
            lut = jnp.clip(lut, 0.0, 255.0)                              # (256, 1)
            mapped = jnp.sum(lut * onehot, axis=0, keepdims=True) * (1.0 / 255.0)
            outs.append(jnp.where(step > 0.0, mapped, xc))
        o_ref[...] = jnp.concatenate(outs, axis=0)[None]

    return pl.pallas_call(
        kernel,
        out_shape=jax.ShapeDtypeStruct((N, C, HW), jnp.float32),
        grid=(N,),
        in_specs=[pl.BlockSpec((1, C, HW), lambda n: (n, 0, 0))],
        out_specs=pl.BlockSpec((1, C, HW), lambda n: (n, 0, 0)),
        compiler_params=_compiler_params(("parallel",)),
    )(slab)


# ----------------------------------------------------------------------------------------------
# op-sequence application with trace-time fusion of consecutive value ops
# ----------------------------------------------------------------------------------------------
def _apply_op_sequence(slab, ops, fill, C, H, W):
    fill_list = [0.0] * C if fill is None else list(fill)
    pending = []

    def flush(s):
        eff = tuple(op for op in pending if op[0] != "Identity")
        pending.clear()
        if eff:
            return _value_ops(s, eff, H, W)
        return s

    for name, mag in ops:
        if name in _VALUE_OPS:
            pending.append((name, mag))
            continue
        slab = flush(slab)
        if name in _GEOM_OPS:
            theta = _geom_theta(name, mag, H, W)
            slab = _affine_gather(slab, theta, fill_list, H, W)
        elif name == "Sharpness":
            slab = _sharpness(slab, 1.0 + mag, H, W)
        elif name == "Equalize":
            slab = _equalize(slab, H, W)
        else:
            raise ValueError(f"The provided operator {name} is not recognized.")
    slab = flush(slab)
    return slab


# ----------------------------------------------------------------------------------------------
# the module
# ----------------------------------------------------------------------------------------------
class StrengthGuidedAugmentSinglePallas:
    """JAX/Pallas port of StrengthGuidedAugmentSingle.forward (NEAREST interpolation only)."""

    def __init__(self, num_ops=2, magnitude=9, num_magnitude_bins=31,
                 interpolation="nearest", fill=None, ablation_aug=None, seed=0):
        assert interpolation == "nearest"  # TODO(synk): bilinear grid_sample path not implemented.
        self.num_ops = num_ops
        self.magnitude = magnitude
        self.num_magnitude_bins = num_magnitude_bins
        self.interpolation = interpolation
        self.fill = fill
        self.op_history = []
        self.fixed = False
        self.ablation_aug = ablation_aug
        self._rng = np.random.default_rng(seed)  # stands in for torch.randint host RNG

    def _augmentation_space(self, num_bins, image_size):
        return {
            "Identity": (np.array(0.0), False),
            "ShearX": (np.linspace(0.0, 0.3, num_bins), True),
            "ShearY": (np.linspace(0.0, 0.3, num_bins), True),
            "TranslateX": (np.linspace(0.0, 150.0 / 331.0 * image_size[0], num_bins), True),
            "TranslateY": (np.linspace(0.0, 150.0 / 331.0 * image_size[1], num_bins), True),
            "Rotate": (np.linspace(0.0, 30.0, num_bins), True),
            "Brightness": (np.linspace(0.0, 0.9, num_bins), True),
            "Color": (np.linspace(0.0, 0.9, num_bins), True),
            "Contrast": (np.linspace(0.0, 0.9, num_bins), True),
            "Sharpness": (np.linspace(0.0, 0.9, num_bins), True),
            "Posterize": (8 - np.round(np.arange(num_bins) / ((num_bins - 1) / 4)).astype(np.int32), False),
            "Solarize": (np.linspace(255.0, 0.0, num_bins), False),
            "AutoContrast": (np.array(0.0), False),
            "Equalize": (np.array(0.0), False),
            "CutOut": (np.linspace(0.0, 0.5, num_bins), False),
        }

    def __call__(self, img):
        N, C, H, W = img.shape
        img = img.astype(jnp.float32)
        fill = self.fill
        if isinstance(fill, (int, float)):
            fill = [float(fill)] * C
        elif fill is not None:
            fill = [float(f) for f in fill]

        if self.fixed is False:
            ops = []
            for _ in range(self.num_ops):
                op_meta = self._augmentation_space(self.num_magnitude_bins, [W, H])
                if self.ablation_aug is None:
                    op_index = int(self._rng.integers(len(op_meta)))
                    op_name = list(op_meta.keys())[op_index]
                else:
                    op_name = self.ablation_aug
                magnitudes, signed = op_meta[op_name]
                magnitude = float(magnitudes[self.magnitude]) if np.ndim(magnitudes) > 0 else 0.0
                if signed and int(self._rng.integers(2)):
                    magnitude *= -1.0
                ops.append((op_name, magnitude))
                self.op_history.append((op_name, magnitude))
            self.fixed = True
        else:
            ops = list(self.op_history)

        slab = img.reshape(N, C, H * W)                                  # free reshape, lane = pixel
        slab = _apply_op_sequence(slab, ops, fill, C, H, W)
        return slab.reshape(N, C, H, W)

    def unfixed(self):
        self.op_history = []
        self.fixed = False


# ----------------------------------------------------------------------------------------------
if __name__ == "__main__":
    key = jax.random.PRNGKey(0)
    img = jax.random.uniform(key, (2, 3, 16, 16), dtype=jnp.float32)     # NCHW, values in [0, 1)

    aug = StrengthGuidedAugmentSinglePallas(num_ops=2, magnitude=9, num_magnitude_bins=31, seed=0)
    out = jax.block_until_ready(aug(img))            # first call: samples ops, applies kernels
    out_replay = jax.block_until_ready(aug(img))     # second call: replays op_history (fixed=True)

    assert out.shape == img.shape and out.dtype == jnp.float32
    assert out_replay.shape == img.shape
    assert bool(jnp.all(jnp.isfinite(out)))
    assert bool(jnp.all(jnp.isfinite(out_replay)))
    print("KERNEL_OK")
</pallas_src>

<mosaic_0001>
module attributes {stable_mosaic.version = 11 : i64} {
  func.func @kernel(%arg0: i32, %arg1: memref<1x3x256xf32, #tpu.memory_space<vmem>>, %arg2: memref<1x3x256xf32, #tpu.memory_space<vmem>>) attributes {dimension_semantics = [#tpu.dimension_semantics<parallel>], iteration_bounds = array<i64: 2>, scalar_prefetch = 0 : i64, scratch_operands = 0 : i64, tpu.core_type = #tpu.core_type<tc>, window_params = [{transform_indices = @transform_0, window_bounds = array<i64: 1, 3, 256>}, {transform_indices = @transform_1, window_bounds = array<i64: 1, 3, 256>}]} {
    %c0 = arith.constant 0 : index
    %c0_0 = arith.constant 0 : index
    %c0_1 = arith.constant 0 : index
    %0 = vector.load %arg1[%c0, %c0_0, %c0_1] : memref<1x3x256xf32, #tpu.memory_space<vmem>>, vector<1x3x256xf32>
    %cst = arith.constant dense<0x7F800000> : vector<1x3xf32>
    %1 = vector.multi_reduction <minimumf>, %0, %cst [2] : vector<1x3x256xf32> to vector<1x3xf32>
    %2 = vector.shape_cast %1 : vector<1x3xf32> to vector<1x3x1xf32>
    %cst_2 = arith.constant dense<0xFF800000> : vector<1x3xf32>
    %3 = vector.multi_reduction <maximumf>, %0, %cst_2 [2] : vector<1x3x256xf32> to vector<1x3xf32>
    %4 = vector.shape_cast %3 : vector<1x3xf32> to vector<1x3x1xf32>
    %5 = arith.subf %4, %2 : vector<1x3x1xf32>
    %cst_3 = arith.constant 0.000000e+00 : f32
    %6 = vector.broadcast %cst_3 : f32 to vector<1x3x1xf32>
    %7 = arith.cmpf ole, %5, %6 : vector<1x3x1xf32>
    %cst_4 = arith.constant 1.000000e+00 : f32
    %8 = vector.broadcast %cst_4 : f32 to vector<1x3x1xf32>
    %9 = arith.select %7, %8, %5 : vector<1x3x1xi1>, vector<1x3x1xf32>
    %cst_5 = arith.constant 1.000000e+00 : f32
    %10 = vector.broadcast %cst_5 : f32 to vector<1x3x1xf32>
    %11 = arith.divf %10, %9 : vector<1x3x1xf32>
    %cst_6 = arith.constant 1.000000e+00 : f32
    %12 = vector.broadcast %cst_6 : f32 to vector<1x3x1xf32>
    %13 = arith.select %7, %12, %11 : vector<1x3x1xi1>, vector<1x3x1xf32>
    %cst_7 = arith.constant 0.000000e+00 : f32
    %14 = vector.broadcast %cst_7 : f32 to vector<1x3x1xf32>
    %15 = arith.select %7, %14, %2 : vector<1x3x1xi1>, vector<1x3x1xf32>
    %16 = vector.broadcast %15 : vector<1x3x1xf32> to vector<1x3x256xf32>
    %17 = arith.subf %0, %16 : vector<1x3x256xf32>
    %18 = vector.broadcast %13 : vector<1x3x1xf32> to vector<1x3x256xf32>
    %19 = arith.mulf %17, %18 : vector<1x3x256xf32>
    %cst_8 = arith.constant 0.000000e+00 : f32
    %cst_9 = arith.constant 1.000000e+00 : f32
    %20 = vector.broadcast %cst_8 : f32 to vector<1x3x256xf32>
    %21 = arith.maximumf %20, %19 : vector<1x3x256xf32>
    %22 = vector.broadcast %cst_9 : f32 to vector<1x3x256xf32>
    %23 = arith.minimumf %22, %21 : vector<1x3x256xf32>
    %c0_10 = arith.constant 0 : index
    %c0_11 = arith.constant 0 : index
    %c0_12 = arith.constant 0 : index
    %24 = vector.load %arg2[%c0_10, %c0_11, %c0_12] : memref<1x3x256xf32, #tpu.memory_space<vmem>>, vector<1x3x256xf32>
    tpu.vector_store %arg2[%c0_10, %c0_11, %c0_12], %23 {strides = array<i32>} : memref<1x3x256xf32, #tpu.memory_space<vmem>>, vector<1x3x256xf32>,
    return
  }
  func.func @transform_0(%arg0: i32) -> (i32, i32, i32) {
    %c0_i32 = arith.constant 0 : i32
    %c0_i32_0 = arith.constant 0 : i32
    %c0_i32_1 = arith.constant 0 : i32
    return %arg0, %c0_i32, %c0_i32_0 : i32, i32, i32
  }
  func.func @transform_1(%arg0: i32) -> (i32, i32, i32) {
    %c0_i32 = arith.constant 0 : i32
    %c0_i32_0 = arith.constant 0 : i32
    %c0_i32_1 = arith.constant 0 : i32
    return %arg0, %c0_i32, %c0_i32_0 : i32, i32, i32
  }
}

</mosaic_0001>

<llo_original>
// kernel: tpu_custom_call.1
$region0: #{tpu_custom_call.1}
  #allocation0 [shape = 'u32[]', space=smem, size = 0x4, offset = 0x4, fixed_abs, tag = 'smem constant byte address 0x4 - core index']
  #allocation1 [shape = 'u32[144,128]{1,0:T(1,128)}', space=vmem, size = 0x12000, scoped, tag = 'internal scratch']
  %s0 = inlined_call_operand.vmem [shape: f32[2,3,256], index: 0, kind: input, shape index: {}]
  %s1 = inlined_call_operand.vmem [shape: f32[2,3,256], index: 1, kind: output, shape index: {}]
  %s2 = sld [smem:[#allocation0]]
  $region37: #{tpu_custom_call.1} parent=0
    _
  %s4 = ssub.s32 1, %s2
  %s5 = scalar_select 0, %s4, %s2
  loop: start=0, step=1, limit=4
  $region2: #{tpu_custom_call.1} parent=0 // loop_pre_header
    _
  $region3: #{tpu_custom_call.1} parent=0 // loop_header
    %s7 = sphi 0, %s11
    %p8 = scmp.ge.s32.totalorder %s7, 4
    %s17 = sphi 0, %s19
    %s20 = sphi 0, %s17
    %s21 = sphi 0, %s20
    %s37 = sphi 0, %s21
    %s43 = sphi 0, %s45
    %s46 = sphi 0, %s43
    %s47 = sphi 0, %s46
    %s63 = sphi 0, %s47
  $region4: #{tpu_custom_call.1} parent=0 // loop_header_branch
    %10 = sbr.rel (%p8) target = $region8
  $region5: #{tpu_custom_call.1} parent=0 // loop_body
    %s12 = ssub.s32 %s7, 1
    %s13 = ssub.s32 %s7, 2
    %s14 = sadd.s32 %s7, 1
    %s15 = ssub.s32 %s7, %s14
    %p16 = scmp.eq.s32.totalorder %s15, 0
    %s18 = sadd.s32 %s17, 1
    %s19 = scalar_select %p16, %s17, %s18
    %p22 = pneg %p16
    %p23 = scmp.eq.s32.totalorder %s7, 1
    %p24 = por %p22, %p23
    %p25 = scmp.ne.s32.totalorder %s17, %s20
    %p26 = scmp.eq.s32.totalorder %s7, 0
    %p27 = por %p25, %p26
    %p28 = scmp.ne.s32.totalorder %s17, %s20
    %p29 = scmp.eq.s32.totalorder %s12, 1
    %p30 = por %p28, %p29
    %p31 = scmp.ne.s32.totalorder %s20, %s21
    %p32 = scmp.eq.s32.totalorder %s12, 0
    %p33 = por %p31, %p32
    %p34 = scmp.ne.s32.totalorder %s20, %s21
    %p35 = scmp.eq.s32.totalorder %s13, 1
    %p36 = por %p34, %p35
    %p38 = scmp.ne.s32.totalorder %s21, %s37
    %p39 = scmp.eq.s32.totalorder %s13, 0
    %p40 = por %p38, %p39
    %s41 = ssub.s32 %s7, %s14
    %p42 = scmp.eq.s32.totalorder %s41, 0
    %s44 = sadd.s32 %s43, 1
    %s45 = scalar_select %p42, %s43, %s44
    %p48 = pneg %p42
    %p49 = scmp.eq.s32.totalorder %s7, 1
    %p50 = por %p48, %p49
    %p51 = scmp.ne.s32.totalorder %s43, %s46
    %p52 = scmp.eq.s32.totalorder %s7, 0
    %p53 = por %p51, %p52
    %p54 = scmp.ne.s32.totalorder %s43, %s46
    %p55 = scmp.eq.s32.totalorder %s12, 1
    %p56 = por %p54, %p55
    %p57 = scmp.ne.s32.totalorder %s46, %s47
    %p58 = scmp.eq.s32.totalorder %s12, 0
    %p59 = por %p57, %p58
    %p60 = scmp.ne.s32.totalorder %s46, %s47
    %p61 = scmp.eq.s32.totalorder %s13, 1
    %p62 = por %p60, %p61
    %p64 = scmp.ne.s32.totalorder %s47, %s63
    %p65 = scmp.eq.s32.totalorder %s13, 0
    %p66 = por %p64, %p65
    %p67 = scmp.le.s32.totalorder 1, %s7
    %p68 = scmp.lt.s32.totalorder %s7, 3
    %p69 = pnand %p67, %p68
    %p70 = pneg %p69
    // Predicated region
    $region9: #{tpu_custom_call.1} parent=5 // pred_check
      _
    $region10: #{tpu_custom_call.1} parent=5 // pred_check_branch
      %72 = sbr.rel (%p69) target = $region12
    $region11: #{tpu_custom_call.1} parent=5 // pred_region
      %s73 = ssub.s32 %s7, 1
    $region12: #{tpu_custom_call.1} parent=5 // pred_fallthru
      _
    %p74 = scmp.lt.s32.totalorder %s7, 2
    // Predicated region
    $region13: #{tpu_custom_call.1} parent=5 // pred_check
      %p75 = pneg %p74
    $region14: #{tpu_custom_call.1} parent=5 // pred_check_branch
      %77 = sbr.rel (%p75) target = $region16
    $region15: #{tpu_custom_call.1} parent=5 // pred_region
      // Predicated region
      $region17: #{tpu_custom_call.1} parent=15 // pred_check
        %p78 = pneg %p27
      $region18: #{tpu_custom_call.1} parent=15 // pred_check_branch
        %80 = sbr.rel (%p78) target = $region20
      $region19: #{tpu_custom_call.1} parent=15 // pred_region
        %p81 = scmp.lt.s32.totalorder %s7, 1
        %s82 = scalar_select %p81, %s7, 1
        %s83 = smul.addr %s82, 2
        %s84 = smul.addr %s83, 4
        %s85 = scalar_lea.vmem %s0, %s84
      $region20: #{tpu_custom_call.1} parent=15 // pred_fallthru
        _
    $region16: #{tpu_custom_call.1} parent=5 // pred_fallthru
      _
    %p86 = scmp.le.s32.totalorder 1, %s7
    %p87 = scmp.lt.s32.totalorder %s7, 3
    %p88 = pnand %p86, %p87
    %p89 = pneg %p88
    // Predicated region
    $region21: #{tpu_custom_call.1} parent=5 // pred_check
      _
    $region22: #{tpu_custom_call.1} parent=5 // pred_check_branch
      %91 = sbr.rel (%p88) target = $region24
    $region23: #{tpu_custom_call.1} parent=5 // pred_region
      %s92 = ssub.s32 %s7, 1
      %p93 = scmp.lt.s32.totalorder %s12, 1
      %s94 = scalar_select %p93, %s12, 1
      %s95 = smul.addr %s94, 2
      %s96 = smul.addr %s95, 4
      %s97 = scalar_lea.vmem %s0, %s96
      %p98 = pneg %p33
      %p99 = pneg %p30
      %p100 = pneg %p59
      %p101 = pneg %p56
      %p102 = scmp.lt.s32.totalorder %s12, 1
      %s103 = scalar_select %p102, %s12, 1
      %s104 = smul.addr %s103, 2
      %s105 = smul.addr %s104, 4
      %s106 = scalar_lea.vmem %s1, %s105
      %p107 = scmp.lt.s32.totalorder %s12, 1
      %s108 = scalar_select %p107, %s12, 1
      %s109 = smul.addr %s108, 2
      %s110 = smul.addr %s109, 4
      %s111 = scalar_lea.vmem %s0, %s110
      %p112 = scmp.lt.s32.totalorder %s12, 1
      %s113 = scalar_select %p112, %s12, 1
      %s114 = smul.addr %s113, 2
      %s115 = smul.addr %s114, 4
      %s116 = scalar_lea.vmem %s1, %s115
      %v117 = vld [vmem:[%s111] sm:$0x77]
      %v119 = vcombine.high %v117, %v117
      %vm121 = vcmask 1042432
      %v122 = vsel %vm121, %v117, inf
      %v123 = vsel %vm121, %v119, inf
      %v124 = vmin.f32 %v122, %v123
      %125 = vmin.xlane.f32.xlu0 %v124
      %v126 = vpop.xlane.xlu0 %125
      %v127 = vsel %vm121, %v117, -inf
      %v128 = vsel %vm121, %v119, -inf
      %v129 = vmax.f32 %v127, %v128
      %130 = vmax.xlane.f32.xlu0 %v129
      %v131 = vpop.xlane.xlu0 %130
      %v132 = vsub.f32 %v131, %v126
      %vm133 = vcmp.le.f32.partialorder %v132, 0.0
      %v134 = vsel %vm133, 1.0, %v132
      %v135 = vrcp.pop %v134
      %v136 = vmul.f32 1.0, %v135
      %v137 = vsel %vm133, 1.0, %v136
      %v138 = vsel %vm133, 0.0, %v126
      %v141 = vunpack.c.l.s4 839922192
      %v142 = vunpack.c.0.s8 %v141
      %v143 = vlaneseq
      %v144 = vshrl.u32 %v143, 7
      %v145 = vsub.s32 %v142, %v144
      %v146 = vrot.slane %v138, %v145
      %v148 = vsub.f32 %v117, %v146
      %v151 = vunpack.c.l.s4 839922192
      %v152 = vunpack.c.0.s8 %v151
      %v153 = vlaneseq
      %v154 = vshrl.u32 %v153, 7
      %v155 = vsub.s32 %v152, %v154
      %v156 = vrot.slane %v137, %v155
      %v158 = vmul.f32 %v148, %v156
      %v159 = vmax.f32 %v158, 0.0
      %v160 = vmin.f32 %v159, 1.0
      %161 = vst [vmem:[%s116] sm:$0x77] %v160
      %p162 = scmp.lt.s32.totalorder %s12, 1
      %s163 = scalar_select %p162, %s12, 1
      %s164 = smul.addr %s163, 2
      %s165 = smul.addr %s164, 4
      %s166 = scalar_lea.vmem %s1, %s165
      // Predicated region
      $region25: #{tpu_custom_call.1} parent=23 // pred_check
        %p167 = pneg %p56
      $region26: #{tpu_custom_call.1} parent=23 // pred_check_branch
        %169 = sbr.rel (%p167) target = $region28
      $region27: #{tpu_custom_call.1} parent=23 // pred_region
        _
      $region28: #{tpu_custom_call.1} parent=23 // pred_fallthru
        _
    $region24: #{tpu_custom_call.1} parent=5 // pred_fallthru
      _
    %p170 = scmp.le.s32.totalorder 2, %s7
    // Predicated region
    $region29: #{tpu_custom_call.1} parent=5 // pred_check
      %p171 = pneg %p170
    $region30: #{tpu_custom_call.1} parent=5 // pred_check_branch
      %173 = sbr.rel (%p171) target = $region32
    $region31: #{tpu_custom_call.1} parent=5 // pred_region
      %s174 = ssub.s32 %s7, 2
      // Predicated region
      $region33: #{tpu_custom_call.1} parent=31 // pred_check
        %p175 = pneg %p62
      $region34: #{tpu_custom_call.1} parent=31 // pred_check_branch
        %177 = sbr.rel (%p175) target = $region36
      $region35: #{tpu_custom_call.1} parent=31 // pred_region
        %p178 = scmp.lt.s32.totalorder %s13, 1
        %s179 = scalar_select %p178, %s13, 1
        %s180 = smul.addr %s179, 2
        %s181 = smul.addr %s180, 4
        %s182 = scalar_lea.vmem %s1, %s181
      $region36: #{tpu_custom_call.1} parent=31 // pred_fallthru
        _
    $region32: #{tpu_custom_call.1} parent=5 // pred_fallthru
      _
  $region6: #{tpu_custom_call.1} parent=0 // loop_footer
    %s11 = sadd.s32 1, %s7
  $region7: #{tpu_custom_call.1} parent=0 // loop_footer_branch
    %6 = sbr.rel target = $region3
  $region8: #{tpu_custom_call.1} parent=0 // loop_exit
    _

</llo_original>
